<compile_context>
chip_gen: v5e
topology: v5e:2x2
jax: 0.10.0
libtpu: 0.0.40
codegen_flags: <defaults>
</compile_context>

<pallas_src>
import jax
import jax.numpy as jnp
from jax.experimental import pallas as pl
from jax.experimental.pallas import tpu as pltpu


_VMEM = pl.BlockSpec(memory_space=pltpu.MemorySpace.VMEM)
_SMEM = pl.BlockSpec(memory_space=pltpu.MemorySpace.SMEM)


# ---------------------------------------------------------------------------
# Fused forward kernel: 4x GCN + readout/sigmoid + disc projections + cos-sim
# ---------------------------------------------------------------------------
def fused_forward_kernel(seqs_ref, adj_ref, diff_ref, wd1_ref, wd2_ref,
                         b1_ref, b2_ref, wdisc_ref, mixw_ref, bcol_ref,
                         alphas_ref, out_ref, pa_ref, pd_ref):
    H = wdisc_ref.shape[0]
    eps = 1e-8

    # ---- Stage 1: feature transform, both views at once.
    # seqs = [seq1 | seq2] on lanes; wd* are block-diag(w, w), so
    # fa = [seq1@w1 | seq2@w1], fd = [seq1@w2 | seq2@w2] with no rearrangement.
    seqs = seqs_ref[...]                                                  # (N, 2*n_in)
    fa = jnp.dot(seqs, wd1_ref[...], preferred_element_type=jnp.float32)  # (N, 2H)
    fd = jnp.dot(seqs, wd2_ref[...], preferred_element_type=jnp.float32)  # (N, 2H)
    # TODO(synk): cast seqs/adj/diff/weights to bfloat16 here on v6e/v7x
    # (keep preferred_element_type=f32); kept f32 for parity at toy shapes.

    # ---- Stage 2: propagation (adj / diff each consumed by one wide matmul).
    ga = jnp.dot(adj_ref[...], fa, preferred_element_type=jnp.float32) + b1_ref[...]
    gd = jnp.dot(diff_ref[...], fd, preferred_element_type=jnp.float32) + b2_ref[...]

    # PReLU (single alpha per GCN, PyTorch default).
    a1 = alphas_ref[0]
    a2 = alphas_ref[1]
    ha = jnp.where(ga > 0.0, ga, a1 * ga)      # (N, 2H) = [h1 | h3]
    hd = jnp.where(gd > 0.0, gd, a2 * gd)      # (N, 2H) = [h2 | h4]

    h1 = ha[:, :H]
    h3 = ha[:, H:]
    h2 = hd[:, :H]
    h4 = hd[:, H:]

    # ---- Readout (mean over nodes, msk=None) + sigmoid, disc matvecs v_i = W @ c_i.
    c1 = 1.0 / (1.0 + jnp.exp(-jnp.mean(h1, axis=0, keepdims=True)))      # (1, H)
    c2 = 1.0 / (1.0 + jnp.exp(-jnp.mean(h2, axis=0, keepdims=True)))      # (1, H)
    w = wdisc_ref[...]
    # nn.Bilinear f_k(h, c): score = h . (W @ c) + b   (MVGRL argument order)
    v1 = jnp.einsum('oe,de->od', c1, w, preferred_element_type=jnp.float32)  # (1, H)
    v2 = jnp.einsum('oe,de->od', c2, w, preferred_element_type=jnp.float32)  # (1, H)

    # ---- Discriminator projections.  Scores are linear in h, so the
    # better_index gather + lam-mixup is folded into two per-column weights
    # (wk = keep, wm = mix); the remaining per-node gather happens on scalars
    # outside the kernel.  Build one (8, 2H) projection matrix per branch and
    # do a single score matmul per branch (output rows are lane-dense (·, N)).
    wk = mixw_ref[0:1, :]                      # (1, H)
    wm = mixw_ref[1:2, :]                      # (1, H)
    pa_ref[...] = jnp.zeros_like(pa_ref)
    pd_ref[...] = jnp.zeros_like(pd_ref)
    pa_ref[3:4, 0:H] = v2                      # row 3: sc_2  = h1 . v2
    pa_ref[6:7, H:2 * H] = v2 * wk             # row 6: T3a   = h3 . (v2*wk)
    pa_ref[7:8, H:2 * H] = v2 * wm             # row 7: T3b   = h3 . (v2*wm)
    pd_ref[2:3, 0:H] = v1                      # row 2: sc_1  = h2 . v1
    pd_ref[4:5, H:2 * H] = v1 * wk             # row 4: T4a   = h4 . (v1*wk)
    pd_ref[5:6, H:2 * H] = v1 * wm             # row 5: T4b   = h4 . (v1*wm)

    scores = (jnp.einsum('kd,nd->kn', pa_ref[...], ha,
                         preferred_element_type=jnp.float32)
              + jnp.einsum('kd,nd->kn', pd_ref[...], hd,
                           preferred_element_type=jnp.float32)
              + bcol_ref[...])                                            # (8, N)
    out_ref[...] = scores

    # ---- Cosine-similarity row-max for both view pairs (rows 0 / 1).
    def rownorm(x):
        return x * jax.lax.rsqrt(jnp.sum(x * x, axis=1, keepdims=True) + eps)

    n1 = rownorm(h1)
    n3 = rownorm(h3)
    n2 = rownorm(h2)
    n4 = rownorm(h4)
    # s[m, n] = cos(hA_m, hB_n); reduce over m -> lanes index hB rows.
    # TODO(synk): at large N keep a transposed normalized copy to avoid the
    # implicit XLU transpose of the transposed-RHS contraction.
    s1 = jnp.einsum('md,nd->mn', n1, n3, preferred_element_type=jnp.float32)
    s2 = jnp.einsum('md,nd->mn', n2, n4, preferred_element_type=jnp.float32)
    out_ref[0:1, :] = jnp.max(s1, axis=0, keepdims=True)   # sim1[n] = max_m cos(h3_n, h1_m)
    out_ref[1:2, :] = jnp.max(s2, axis=0, keepdims=True)   # sim2[n] = max_m cos(h4_n, h2_m)


def _block_diag2(w):
    """(n_in, H) -> block_diag(w, w) of shape (2*n_in, 2H)."""
    z = jnp.zeros_like(w)
    top = jnp.concatenate([w, z], axis=1)
    bot = jnp.concatenate([z, w], axis=1)
    return jnp.concatenate([top, bot], axis=0)


def fused_forward(seq1, seq2, adj, diff, params, lam=0.35):
    """seq*: (N, n_in); adj/diff: (N, N).

    Returns an (8, N) f32 slab:
      row 0: sim1   row 1: sim2
      row 2: sc_1   row 3: sc_2
      row 4: T4a+b  row 5: T4b   (sc_3[r] = T4a[bi2[r]] + T4b[bi2[perm[r]]])
      row 6: T3a+b  row 7: T3b   (sc_4[r] = T3a[bi1[r]] + T3b[bi1[perm[r]]])
    """
    N, _ = seq1.shape
    H = params['gcn1_w'].shape[1]

    seqs = jnp.concatenate([seq1, seq2], axis=1)                          # (N, 2*n_in)
    wd1 = _block_diag2(params['gcn1_w'])                                  # (2*n_in, 2H)
    wd2 = _block_diag2(params['gcn2_w'])
    b1t = jnp.concatenate([params['gcn1_b'], params['gcn1_b']], axis=1)   # (1, 2H)
    b2t = jnp.concatenate([params['gcn2_b'], params['gcn2_b']], axis=1)
    alphas = jnp.concatenate([params['gcn1_a'], params['gcn2_a']])        # (2,)

    mix_cols = jnp.zeros((H,), jnp.float32).at[jnp.arange(0, H, 6)].set(1.0)
    mix_w = jnp.stack([1.0 - lam * mix_cols, lam * mix_cols], axis=0)     # (2, H)

    b = params['disc_b'][0]
    bcol = jnp.zeros((8, 1), jnp.float32).at[jnp.array([2, 3, 4, 6]), 0].set(b)

    return pl.pallas_call(
        fused_forward_kernel,
        out_shape=jax.ShapeDtypeStruct((8, N), jnp.float32),
        in_specs=[_VMEM] * 10 + [_SMEM],
        out_specs=_VMEM,
        scratch_shapes=[pltpu.VMEM((8, 2 * H), jnp.float32),
                        pltpu.VMEM((8, 2 * H), jnp.float32)],
        # TODO(synk): set pltpu.CompilerParams(vmem_limit_bytes=...) and a
        # tiled grid with dimension_semantics=("parallel","arbitrary") when
        # scaling N beyond whole-array VMEM residency.
    )(seqs, adj, diff, wd1, wd2, b1t, b2t,
      params['disc_w'], mix_w, bcol, alphas)


# ---------------------------------------------------------------------------
# Model glue (plain JAX: only argsort + scalar gathers remain outside)
# ---------------------------------------------------------------------------
def init_params(key, n_in, n_h):
    ks = jax.random.split(key, 8)
    return {
        'gcn1_w': jax.random.normal(ks[0], (n_in, n_h), jnp.float32) * 0.1,
        'gcn1_b': jnp.zeros((1, n_h), jnp.float32),
        'gcn1_a': jnp.array([0.25], jnp.float32),        # PReLU default
        'gcn2_w': jax.random.normal(ks[1], (n_in, n_h), jnp.float32) * 0.1,
        'gcn2_b': jnp.zeros((1, n_h), jnp.float32),
        'gcn2_a': jnp.array([0.25], jnp.float32),
        # gcn3 is defined in __init__ but never used in forward()
        'gcn3_w': jax.random.normal(ks[2], (n_h, n_h), jnp.float32) * 0.1,
        'gcn3_b': jnp.zeros((1, n_h), jnp.float32),
        'gcn3_a': jnp.array([0.25], jnp.float32),
        'disc_w': jax.random.normal(ks[3], (n_h, n_h), jnp.float32) * 0.1,
        'disc_b': jnp.zeros((1,), jnp.float32),
    }


def model_forward(params, seq1, seq2, adj, diff, sparse, msk,
                  samp_bias1, samp_bias2, epoch):
    # TODO(synk): sparse spmm path and msk!=None masked-readout path not implemented.
    assert not sparse and msk is None
    N = seq1.shape[1]
    num_l = int(N * 0.15)
    num_h = int(N * 0.95)
    num = (num_h - num_l) * 1

    out = fused_forward(seq1[0], seq2[0], adj[0], diff[0], params)        # (8, N)

    # TODO(synk): epoch==50 matplotlib/np.polyfit plotting branch omitted
    # (host-side visualization, no Pallas equivalent).
    better_index1 = jnp.argsort(out[0])[num_l:num_h]
    better_index2 = jnp.argsort(out[1])[num_l:num_h]

    # deterministic stand-in for np.random.permutation
    idx = jax.random.permutation(jax.random.PRNGKey(123), num)

    sc_1 = out[2]                                          # (N,)
    sc_2 = out[3]                                          # (N,)
    # score is linear in h -> row-gather + lam-mixup reduces to scalar gathers
    sc_3 = out[4][better_index2] + out[5][better_index2[idx]]   # (num,)
    sc_4 = out[6][better_index1] + out[7][better_index1[idx]]   # (num,)

    if samp_bias1 is not None:
        sb1 = jnp.ravel(jnp.asarray(samp_bias1))
        sc_1 = sc_1 + sb1
        sc_2 = sc_2 + sb1
    if samp_bias2 is not None:
        sb2 = jnp.ravel(jnp.asarray(samp_bias2))
        sc_3 = sc_3 + sb2
        sc_4 = sc_4 + sb2

    ret = jnp.concatenate([sc_1, sc_2, sc_3, sc_4])[None, :]   # (1, 2N + 2*num)
    return ret, num


# ---------------------------------------------------------------------------
# main
# ---------------------------------------------------------------------------
if __name__ == "__main__":
    N, n_in, n_h = 32, 16, 32
    key = jax.random.PRNGKey(0)
    ks = jax.random.split(key, 6)

    seq1 = jax.random.normal(ks[0], (1, N, n_in), jnp.float32)
    perm = jax.random.permutation(ks[1], N)
    seq2 = seq1[:, perm, :]                              # corrupted (shuffled) view

    adj = jax.random.uniform(ks[2], (1, N, N), jnp.float32)
    adj = 0.5 * (adj + jnp.transpose(adj, (0, 2, 1)))
    adj = adj / jnp.sum(adj, axis=2, keepdims=True)      # row-normalized
    diff = jax.random.uniform(ks[3], (1, N, N), jnp.float32)
    diff = diff / jnp.sum(diff, axis=2, keepdims=True)

    params = init_params(jax.random.PRNGKey(42), n_in, n_h)

    ret, num = model_forward(params, seq1, seq2, adj, diff,
                             sparse=False, msk=None,
                             samp_bias1=None, samp_bias2=None, epoch=1)
    jax.block_until_ready(ret)
    assert ret.shape == (1, 2 * N + 2 * num), ret.shape
    assert bool(jnp.all(jnp.isfinite(ret)))
    print("KERNEL_OK")
</pallas_src>

<mosaic_0001>
module attributes {stable_mosaic.version = 11 : i64} {
  func.func @fused_forward_kernel(%arg0: memref<32x32xf32, #tpu.memory_space<vmem>>, %arg1: memref<32x32xf32, #tpu.memory_space<vmem>>, %arg2: memref<32x32xf32, #tpu.memory_space<vmem>>, %arg3: memref<32x64xf32, #tpu.memory_space<vmem>>, %arg4: memref<32x64xf32, #tpu.memory_space<vmem>>, %arg5: memref<1x64xf32, #tpu.memory_space<vmem>>, %arg6: memref<1x64xf32, #tpu.memory_space<vmem>>, %arg7: memref<32x32xf32, #tpu.memory_space<vmem>>, %arg8: memref<2x32xf32, #tpu.memory_space<vmem>>, %arg9: memref<8x1xf32, #tpu.memory_space<vmem>>, %arg10: memref<2xf32, #tpu.memory_space<smem>>, %arg11: memref<8x32xf32, #tpu.memory_space<vmem>>, %arg12: memref<8x64xf32, #tpu.memory_space<vmem>>, %arg13: memref<8x64xf32, #tpu.memory_space<vmem>>) attributes {dimension_semantics = [], scalar_prefetch = 0 : i64, scratch_operands = 2 : i64, tpu.core_type = #tpu.core_type<tc>} {
    %c0 = arith.constant 0 : index
    %c0_0 = arith.constant 0 : index
    %0 = vector.load %arg0[%c0, %c0_0] : memref<32x32xf32, #tpu.memory_space<vmem>>, vector<32x32xf32>
    %c0_1 = arith.constant 0 : index
    %c0_2 = arith.constant 0 : index
    %1 = vector.load %arg3[%c0_1, %c0_2] : memref<32x64xf32, #tpu.memory_space<vmem>>, vector<32x64xf32>
    %cst = arith.constant dense<0.000000e+00> : vector<32x64xf32>
    %2 = tpu.matmul %0, %1, %cst {dimension_numbers = #tpu.dot_dimension_numbers<[1], [0], [0], [1], [0, 0, 1, 1], [], []>} : vector<32x32xf32>, vector<32x64xf32>, vector<32x64xf32> -> vector<32x64xf32>
    %c0_3 = arith.constant 0 : index
    %c0_4 = arith.constant 0 : index
    %3 = vector.load %arg4[%c0_3, %c0_4] : memref<32x64xf32, #tpu.memory_space<vmem>>, vector<32x64xf32>
    %cst_5 = arith.constant dense<0.000000e+00> : vector<32x64xf32>
    %4 = tpu.matmul %0, %3, %cst_5 {dimension_numbers = #tpu.dot_dimension_numbers<[1], [0], [0], [1], [0, 0, 1, 1], [], []>} : vector<32x32xf32>, vector<32x64xf32>, vector<32x64xf32> -> vector<32x64xf32>
    %c0_6 = arith.constant 0 : index
    %c0_7 = arith.constant 0 : index
    %5 = vector.load %arg1[%c0_6, %c0_7] : memref<32x32xf32, #tpu.memory_space<vmem>>, vector<32x32xf32>
    %cst_8 = arith.constant dense<0.000000e+00> : vector<32x64xf32>
    %6 = tpu.matmul %5, %2, %cst_8 {dimension_numbers = #tpu.dot_dimension_numbers<[1], [0], [0], [1], [0, 0, 1, 1], [], []>} : vector<32x32xf32>, vector<32x64xf32>, vector<32x64xf32> -> vector<32x64xf32>
    %c0_9 = arith.constant 0 : index
    %c0_10 = arith.constant 0 : index
    %7 = vector.load %arg5[%c0_9, %c0_10] : memref<1x64xf32, #tpu.memory_space<vmem>>, vector<1x64xf32>
    %8 = vector.broadcast %7 : vector<1x64xf32> to vector<32x64xf32>
    %9 = arith.addf %6, %8 : vector<32x64xf32>
    %c0_11 = arith.constant 0 : index
    %c0_12 = arith.constant 0 : index
    %10 = vector.load %arg2[%c0_11, %c0_12] : memref<32x32xf32, #tpu.memory_space<vmem>>, vector<32x32xf32>
    %cst_13 = arith.constant dense<0.000000e+00> : vector<32x64xf32>
    %11 = tpu.matmul %10, %4, %cst_13 {dimension_numbers = #tpu.dot_dimension_numbers<[1], [0], [0], [1], [0, 0, 1, 1], [], []>} : vector<32x32xf32>, vector<32x64xf32>, vector<32x64xf32> -> vector<32x64xf32>
    %c0_14 = arith.constant 0 : index
    %c0_15 = arith.constant 0 : index
    %12 = vector.load %arg6[%c0_14, %c0_15] : memref<1x64xf32, #tpu.memory_space<vmem>>, vector<1x64xf32>
    %13 = vector.broadcast %12 : vector<1x64xf32> to vector<32x64xf32>
    %14 = arith.addf %11, %13 : vector<32x64xf32>
    %c0_16 = arith.constant 0 : index
    %15 = memref.load %arg10[%c0_16] : memref<2xf32, #tpu.memory_space<smem>>
    %c1 = arith.constant 1 : index
    %16 = memref.load %arg10[%c1] : memref<2xf32, #tpu.memory_space<smem>>
    %cst_17 = arith.constant 0.000000e+00 : f32
    %17 = vector.broadcast %cst_17 : f32 to vector<32x64xf32>
    %18 = arith.cmpf ogt, %9, %17 : vector<32x64xf32>
    %19 = vector.broadcast %15 : f32 to vector<32x64xf32>
    %20 = arith.mulf %19, %9 : vector<32x64xf32>
    %21 = arith.select %18, %9, %20 : vector<32x64xi1>, vector<32x64xf32>
    %cst_18 = arith.constant 0.000000e+00 : f32
    %22 = vector.broadcast %cst_18 : f32 to vector<32x64xf32>
    %23 = arith.cmpf ogt, %14, %22 : vector<32x64xf32>
    %24 = vector.broadcast %16 : f32 to vector<32x64xf32>
    %25 = arith.mulf %24, %14 : vector<32x64xf32>
    %26 = arith.select %23, %14, %25 : vector<32x64xi1>, vector<32x64xf32>
    %27 = vector.extract_strided_slice %21 {offsets = [0, 0], sizes = [32, 32], strides = [1, 1]} : vector<32x64xf32> to vector<32x32xf32>
    %28 = vector.extract_strided_slice %21 {offsets = [0, 32], sizes = [32, 32], strides = [1, 1]} : vector<32x64xf32> to vector<32x32xf32>
    %29 = vector.extract_strided_slice %26 {offsets = [0, 0], sizes = [32, 32], strides = [1, 1]} : vector<32x64xf32> to vector<32x32xf32>
    %30 = vector.extract_strided_slice %26 {offsets = [0, 32], sizes = [32, 32], strides = [1, 1]} : vector<32x64xf32> to vector<32x32xf32>
    %cst_19 = arith.constant dense<0.000000e+00> : vector<32xf32>
    %31 = vector.multi_reduction <add>, %27, %cst_19 [0] : vector<32x32xf32> to vector<32xf32>
    %32 = vector.shape_cast %31 : vector<32xf32> to vector<1x32xf32>
    %cst_20 = arith.constant 3.200000e+01 : f32
    %33 = vector.broadcast %cst_20 : f32 to vector<1x32xf32>
    %34 = arith.divf %32, %33 : vector<1x32xf32>
    %cst_21 = arith.constant 0.000000e+00 : f32
    %35 = vector.broadcast %cst_21 : f32 to vector<1x32xf32>
    %36 = arith.subf %35, %34 : vector<1x32xf32>
    %37 = math.exp %36 : vector<1x32xf32>
    %cst_22 = arith.constant 1.000000e+00 : f32
    %38 = vector.broadcast %cst_22 : f32 to vector<1x32xf32>
    %39 = arith.addf %38, %37 : vector<1x32xf32>
    %cst_23 = arith.constant 1.000000e+00 : f32
    %40 = vector.broadcast %cst_23 : f32 to vector<1x32xf32>
    %41 = arith.divf %40, %39 : vector<1x32xf32>
    %cst_24 = arith.constant dense<0.000000e+00> : vector<32xf32>
    %42 = vector.multi_reduction <add>, %29, %cst_24 [0] : vector<32x32xf32> to vector<32xf32>
    %43 = vector.shape_cast %42 : vector<32xf32> to vector<1x32xf32>
    %cst_25 = arith.constant 3.200000e+01 : f32
    %44 = vector.broadcast %cst_25 : f32 to vector<1x32xf32>
    %45 = arith.divf %43, %44 : vector<1x32xf32>
    %cst_26 = arith.constant 0.000000e+00 : f32
    %46 = vector.broadcast %cst_26 : f32 to vector<1x32xf32>
    %47 = arith.subf %46, %45 : vector<1x32xf32>
    %48 = math.exp %47 : vector<1x32xf32>
    %cst_27 = arith.constant 1.000000e+00 : f32
    %49 = vector.broadcast %cst_27 : f32 to vector<1x32xf32>
    %50 = arith.addf %49, %48 : vector<1x32xf32>
    %cst_28 = arith.constant 1.000000e+00 : f32
    %51 = vector.broadcast %cst_28 : f32 to vector<1x32xf32>
    %52 = arith.divf %51, %50 : vector<1x32xf32>
    %c0_29 = arith.constant 0 : index
    %c0_30 = arith.constant 0 : index
    %53 = vector.load %arg7[%c0_29, %c0_30] : memref<32x32xf32, #tpu.memory_space<vmem>>, vector<32x32xf32>
    "tpu.trace_start"() <{level = 10 : i32, message = "oe,de->od"}> : () -> ()
    %cst_31 = arith.constant dense<0.000000e+00> : vector<1x32xf32>
    %54 = tpu.matmul %41, %53, %cst_31 {dimension_numbers = #tpu.dot_dimension_numbers<[1], [1], [0], [0], [0, 0, 1, 0], [], []>} : vector<1x32xf32>, vector<32x32xf32>, vector<1x32xf32> -> vector<1x32xf32>
    %cst_32 = arith.constant dense<0.000000e+00> : vector<1x32xf32>
    %55 = tpu.matmul %52, %53, %cst_32 {dimension_numbers = #tpu.dot_dimension_numbers<[1], [1], [0], [0], [0, 0, 1, 0], [], []>} : vector<1x32xf32>, vector<32x32xf32>, vector<1x32xf32> -> vector<1x32xf32>
    "tpu.trace_stop"() : () -> ()
    %c0_33 = arith.constant 0 : index
    %c0_34 = arith.constant 0 : index
    %56 = vector.load %arg8[%c0_33, %c0_34] : memref<2x32xf32, #tpu.memory_space<vmem>>, vector<1x32xf32>
    %c1_35 = arith.constant 1 : index
    %c0_36 = arith.constant 0 : index
    %57 = vector.load %arg8[%c1_35, %c0_36] : memref<2x32xf32, #tpu.memory_space<vmem>>, vector<1x32xf32>
    %cst_37 = arith.constant 0.000000e+00 : f32
    %58 = vector.broadcast %cst_37 : f32 to vector<8x64xf32>
    %c0_38 = arith.constant 0 : index
    %c0_39 = arith.constant 0 : index
    %59 = vector.load %arg12[%c0_38, %c0_39] : memref<8x64xf32, #tpu.memory_space<vmem>>, vector<8x64xf32>
    tpu.vector_store %arg12[%c0_38, %c0_39], %58 {strides = array<i32>} : memref<8x64xf32, #tpu.memory_space<vmem>>, vector<8x64xf32>,
    %cst_40 = arith.constant 0.000000e+00 : f32
    %60 = vector.broadcast %cst_40 : f32 to vector<8x64xf32>
    %c0_41 = arith.constant 0 : index
    %c0_42 = arith.constant 0 : index
    %61 = vector.load %arg13[%c0_41, %c0_42] : memref<8x64xf32, #tpu.memory_space<vmem>>, vector<8x64xf32>
    tpu.vector_store %arg13[%c0_41, %c0_42], %60 {strides = array<i32>} : memref<8x64xf32, #tpu.memory_space<vmem>>, vector<8x64xf32>,
    %c3 = arith.constant 3 : index
    %c0_43 = arith.constant 0 : index
    %62 = vector.load %arg12[%c3, %c0_43] : memref<8x64xf32, #tpu.memory_space<vmem>>, vector<1x32xf32>
    tpu.vector_store %arg12[%c3, %c0_43], %55 {strides = array<i32>} : memref<8x64xf32, #tpu.memory_space<vmem>>, vector<1x32xf32>,
    %63 = arith.mulf %55, %56 : vector<1x32xf32>
    %c6 = arith.constant 6 : index
    %c32 = arith.constant 32 : index
    %64 = vector.load %arg12[%c6, %c32] : memref<8x64xf32, #tpu.memory_space<vmem>>, vector<1x32xf32>
    tpu.vector_store %arg12[%c6, %c32], %63 {strides = array<i32>} : memref<8x64xf32, #tpu.memory_space<vmem>>, vector<1x32xf32>,
    %65 = arith.mulf %55, %57 : vector<1x32xf32>
    %c7 = arith.constant 7 : index
    %c32_44 = arith.constant 32 : index
    %66 = vector.load %arg12[%c7, %c32_44] : memref<8x64xf32, #tpu.memory_space<vmem>>, vector<1x32xf32>
    tpu.vector_store %arg12[%c7, %c32_44], %65 {strides = array<i32>} : memref<8x64xf32, #tpu.memory_space<vmem>>, vector<1x32xf32>,
    %c2 = arith.constant 2 : index
    %c0_45 = arith.constant 0 : index
    %67 = vector.load %arg13[%c2, %c0_45] : memref<8x64xf32, #tpu.memory_space<vmem>>, vector<1x32xf32>
    tpu.vector_store %arg13[%c2, %c0_45], %54 {strides = array<i32>} : memref<8x64xf32, #tpu.memory_space<vmem>>, vector<1x32xf32>,
    %68 = arith.mulf %54, %56 : vector<1x32xf32>
    %c4 = arith.constant 4 : index
    %c32_46 = arith.constant 32 : index
    %69 = vector.load %arg13[%c4, %c32_46] : memref<8x64xf32, #tpu.memory_space<vmem>>, vector<1x32xf32>
    tpu.vector_store %arg13[%c4, %c32_46], %68 {strides = array<i32>} : memref<8x64xf32, #tpu.memory_space<vmem>>, vector<1x32xf32>,
    %70 = arith.mulf %54, %57 : vector<1x32xf32>
    %c5 = arith.constant 5 : index
    %c32_47 = arith.constant 32 : index
    %71 = vector.load %arg13[%c5, %c32_47] : memref<8x64xf32, #tpu.memory_space<vmem>>, vector<1x32xf32>
    tpu.vector_store %arg13[%c5, %c32_47], %70 {strides = array<i32>} : memref<8x64xf32, #tpu.memory_space<vmem>>, vector<1x32xf32>,
    %c0_48 = arith.constant 0 : index
    %c0_49 = arith.constant 0 : index
    %72 = vector.load %arg12[%c0_48, %c0_49] : memref<8x64xf32, #tpu.memory_space<vmem>>, vector<8x64xf32>
    "tpu.trace_start"() <{level = 10 : i32, message = "kd,nd->kn"}> : () -> ()
    %cst_50 = arith.constant dense<0.000000e+00> : vector<8x32xf32>
    %73 = tpu.matmul %72, %21, %cst_50 {dimension_numbers = #tpu.dot_dimension_numbers<[1], [1], [0], [0], [0, 0, 1, 0], [], []>} : vector<8x64xf32>, vector<32x64xf32>, vector<8x32xf32> -> vector<8x32xf32>
    "tpu.trace_stop"() : () -> ()
    %c0_51 = arith.constant 0 : index
    %c0_52 = arith.constant 0 : index
    %74 = vector.load %arg13[%c0_51, %c0_52] : memref<8x64xf32, #tpu.memory_space<vmem>>, vector<8x64xf32>
    "tpu.trace_start"() <{level = 10 : i32, message = "kd,nd->kn"}> : () -> ()
    %cst_53 = arith.constant dense<0.000000e+00> : vector<8x32xf32>
    %75 = tpu.matmul %74, %26, %cst_53 {dimension_numbers = #tpu.dot_dimension_numbers<[1], [1], [0], [0], [0, 0, 1, 0], [], []>} : vector<8x64xf32>, vector<32x64xf32>, vector<8x32xf32> -> vector<8x32xf32>
    "tpu.trace_stop"() : () -> ()
    %76 = arith.addf %73, %75 : vector<8x32xf32>
    %c0_54 = arith.constant 0 : index
    %c0_55 = arith.constant 0 : index
    %77 = vector.load %arg9[%c0_54, %c0_55] : memref<8x1xf32, #tpu.memory_space<vmem>>, vector<8x1xf32>
    %78 = vector.broadcast %77 : vector<8x1xf32> to vector<8x32xf32>
    %79 = arith.addf %76, %78 : vector<8x32xf32>
    %c0_56 = arith.constant 0 : index
    %c0_57 = arith.constant 0 : index
    %80 = vector.load %arg11[%c0_56, %c0_57] : memref<8x32xf32, #tpu.memory_space<vmem>>, vector<8x32xf32>
    tpu.vector_store %arg11[%c0_56, %c0_57], %79 {strides = array<i32>} : memref<8x32xf32, #tpu.memory_space<vmem>>, vector<8x32xf32>,
    %81 = arith.mulf %27, %27 : vector<32x32xf32>
    %cst_58 = arith.constant dense<0.000000e+00> : vector<32xf32>
    %82 = vector.multi_reduction <add>, %81, %cst_58 [1] : vector<32x32xf32> to vector<32xf32>
    %83 = vector.shape_cast %82 : vector<32xf32> to vector<32x1xf32>
    %cst_59 = arith.constant 9.99999993E-9 : f32
    %84 = vector.broadcast %cst_59 : f32 to vector<32x1xf32>
    %85 = arith.addf %83, %84 : vector<32x1xf32>
    %86 = math.rsqrt %85 : vector<32x1xf32>
    %87 = vector.broadcast %86 : vector<32x1xf32> to vector<32x32xf32>
    %88 = arith.mulf %27, %87 : vector<32x32xf32>
    %89 = arith.mulf %28, %28 : vector<32x32xf32>
    %cst_60 = arith.constant dense<0.000000e+00> : vector<32xf32>
    %90 = vector.multi_reduction <add>, %89, %cst_60 [1] : vector<32x32xf32> to vector<32xf32>
    %91 = vector.shape_cast %90 : vector<32xf32> to vector<32x1xf32>
    %cst_61 = arith.constant 9.99999993E-9 : f32
    %92 = vector.broadcast %cst_61 : f32 to vector<32x1xf32>
    %93 = arith.addf %91, %92 : vector<32x1xf32>
    %94 = math.rsqrt %93 : vector<32x1xf32>
    %95 = vector.broadcast %94 : vector<32x1xf32> to vector<32x32xf32>
    %96 = arith.mulf %28, %95 : vector<32x32xf32>
    %97 = arith.mulf %29, %29 : vector<32x32xf32>
    %cst_62 = arith.constant dense<0.000000e+00> : vector<32xf32>
    %98 = vector.multi_reduction <add>, %97, %cst_62 [1] : vector<32x32xf32> to vector<32xf32>
    %99 = vector.shape_cast %98 : vector<32xf32> to vector<32x1xf32>
    %cst_63 = arith.constant 9.99999993E-9 : f32
    %100 = vector.broadcast %cst_63 : f32 to vector<32x1xf32>
    %101 = arith.addf %99, %100 : vector<32x1xf32>
    %102 = math.rsqrt %101 : vector<32x1xf32>
    %103 = vector.broadcast %102 : vector<32x1xf32> to vector<32x32xf32>
    %104 = arith.mulf %29, %103 : vector<32x32xf32>
    %105 = arith.mulf %30, %30 : vector<32x32xf32>
    %cst_64 = arith.constant dense<0.000000e+00> : vector<32xf32>
    %106 = vector.multi_reduction <add>, %105, %cst_64 [1] : vector<32x32xf32> to vector<32xf32>
    %107 = vector.shape_cast %106 : vector<32xf32> to vector<32x1xf32>
    %cst_65 = arith.constant 9.99999993E-9 : f32
    %108 = vector.broadcast %cst_65 : f32 to vector<32x1xf32>
    %109 = arith.addf %107, %108 : vector<32x1xf32>
    %110 = math.rsqrt %109 : vector<32x1xf32>
    %111 = vector.broadcast %110 : vector<32x1xf32> to vector<32x32xf32>
    %112 = arith.mulf %30, %111 : vector<32x32xf32>
    "tpu.trace_start"() <{level = 10 : i32, message = "md,nd->mn"}> : () -> ()
    %cst_66 = arith.constant dense<0.000000e+00> : vector<32x32xf32>
    %113 = tpu.matmul %88, %96, %cst_66 {dimension_numbers = #tpu.dot_dimension_numbers<[1], [1], [0], [0], [0, 0, 1, 0], [], []>} : vector<32x32xf32>, vector<32x32xf32>, vector<32x32xf32> -> vector<32x32xf32>
    %cst_67 = arith.constant dense<0.000000e+00> : vector<32x32xf32>
    %114 = tpu.matmul %104, %112, %cst_67 {dimension_numbers = #tpu.dot_dimension_numbers<[1], [1], [0], [0], [0, 0, 1, 0], [], []>} : vector<32x32xf32>, vector<32x32xf32>, vector<32x32xf32> -> vector<32x32xf32>
    "tpu.trace_stop"() : () -> ()
    %cst_68 = arith.constant dense<0xFF800000> : vector<32xf32>
    %115 = vector.multi_reduction <maximumf>, %113, %cst_68 [0] : vector<32x32xf32> to vector<32xf32>
    %116 = vector.shape_cast %115 : vector<32xf32> to vector<1x32xf32>
    %c0_69 = arith.constant 0 : index
    %c0_70 = arith.constant 0 : index
    %117 = vector.load %arg11[%c0_69, %c0_70] : memref<8x32xf32, #tpu.memory_space<vmem>>, vector<1x32xf32>
    tpu.vector_store %arg11[%c0_69, %c0_70], %116 {strides = array<i32>} : memref<8x32xf32, #tpu.memory_space<vmem>>, vector<1x32xf32>,
    %cst_71 = arith.constant dense<0xFF800000> : vector<32xf32>
    %118 = vector.multi_reduction <maximumf>, %114, %cst_71 [0] : vector<32x32xf32> to vector<32xf32>
    %119 = vector.shape_cast %118 : vector<32xf32> to vector<1x32xf32>
    %c1_72 = arith.constant 1 : index
    %c0_73 = arith.constant 0 : index
    %120 = vector.load %arg11[%c1_72, %c0_73] : memref<8x32xf32, #tpu.memory_space<vmem>>, vector<1x32xf32>
    tpu.vector_store %arg11[%c1_72, %c0_73], %119 {strides = array<i32>} : memref<8x32xf32, #tpu.memory_space<vmem>>, vector<1x32xf32>,
    return
  }
}

</mosaic_0001>

<llo_original>
// kernel: tpu_custom_call.1
$region0: #{tpu_custom_call.1}
  #allocation0 [shape = 'u32[]', space=smem, size = 0x4, offset = 0x4, fixed_abs, tag = 'smem constant byte address 0x4 - core index']
  #allocation1 [shape = 'u32[72,128]{1,0:T(1,128)}', space=vmem, size = 0x9000, scoped, tag = 'internal scratch']
  #allocation2 [shape = 'f32[8,64]{1,0:T(8,128)}', space=vmem, size = 0x1000, scoped, tag = 'scratch operand']
  #allocation3 [shape = 'f32[8,64]{1,0:T(8,128)}', space=vmem, size = 0x1000, scoped, tag = 'scratch operand']
  %s0 = inlined_call_operand.hbm [shape: f32[32,32], index: 0, kind: input, shape index: {}]
  %s1 = inlined_call_operand.hbm [shape: f32[32,32], index: 1, kind: input, shape index: {}]
  %s2 = inlined_call_operand.hbm [shape: f32[32,32], index: 2, kind: input, shape index: {}]
  %s3 = inlined_call_operand.hbm [shape: f32[32,64], index: 3, kind: input, shape index: {}]
  %s4 = inlined_call_operand.hbm [shape: f32[32,64], index: 4, kind: input, shape index: {}]
  %s5 = inlined_call_operand.vmem [shape: f32[1,64], index: 5, kind: input, shape index: {}]
  %s6 = inlined_call_operand.vmem [shape: f32[1,64], index: 6, kind: input, shape index: {}]
  %s7 = inlined_call_operand.hbm [shape: f32[32,32], index: 7, kind: input, shape index: {}]
  %s8 = inlined_call_operand.vmem [shape: f32[2,32], index: 8, kind: input, shape index: {}]
  %s9 = inlined_call_operand.vmem [shape: f32[8,1], index: 9, kind: input, shape index: {}]
  %s10 = inlined_call_operand.vmem [shape: f32[2], index: 10, kind: input, shape index: {}]
  %s11 = inlined_call_operand.hbm [shape: f32[8,32], index: 11, kind: output, shape index: {}]
  %s12 = sld [smem:[#allocation0]]
  $region82: #{tpu_custom_call.1} parent=0
    _
  %s14 = ssub.s32 1, %s12
  %s15 = scalar_select 0, %s14, %s12
  $region1: #{tpu_custom_call.1} parent=0
    #allocation4 [shape = 'u8[16384]{0}', space=vmem, size = 0x4000, scoped, tag = 'input window, operand 0, single buffered']
    #allocation5 [shape = 's32[1]{0}', space=sflag, size = 0x4, scoped, tag = 'scoped memory for tpu_custom_call.1']
    #allocation6 [shape = 's32[1]{0}', space=sflag, size = 0x4, scoped, tag = 'scoped memory for tpu_custom_call.1']
    #allocation7 [shape = 's32[1]{0}', space=sflag, size = 0x4, scoped, tag = 'scoped memory for tpu_custom_call.1']
    #allocation8 [shape = 'u8[16384]{0}', space=vmem, size = 0x4000, scoped, tag = 'input window, operand 1, single buffered']
    #allocation9 [shape = 's32[1]{0}', space=sflag, size = 0x4, scoped, tag = 'scoped memory for tpu_custom_call.1']
    #allocation10 [shape = 'u8[16384]{0}', space=vmem, size = 0x4000, scoped, tag = 'input window, operand 2, single buffered']
    #allocation11 [shape = 'u8[16384]{0}', space=vmem, size = 0x4000, scoped, tag = 'input window, operand 3, single buffered']
    #allocation12 [shape = 's32[1]{0}', space=sflag, size = 0x4, scoped, tag = 'scoped memory for tpu_custom_call.1']
    #allocation13 [shape = 'u8[16384]{0}', space=vmem, size = 0x4000, scoped, tag = 'input window, operand 4, single buffered']
    #allocation14 [shape = 'u8[16384]{0}', space=vmem, size = 0x4000, scoped, tag = 'input window, operand 7, single buffered']
    #allocation15 [shape = 's32[1]{0}', space=sflag, size = 0x4, scoped, tag = 'scoped memory for tpu_custom_call.1']
    #allocation16 [shape = 'u8[512]{0}', space=smem, size = 0x200, scoped, tag = 'input window, operand 10, single buffered']
    #allocation17 [shape = 'u8[4096]{0}', space=vmem, size = 0x1000, scoped, tag = 'output window, operand 0, single buffered']
    %16 = vsyncpa [#allocation5], 0
    %17 = vsyncpa [#allocation9], 0
    %18 = vsyncpa [#allocation12], 0
    %19 = vsyncpa [#allocation15], 0
    %20 = vsyncpa [#allocation7], 0
    %21 = vsyncpa [#allocation6], 0
    // Predicated region
    $region2: #{tpu_custom_call.1} parent=1 // pred_check
      _
    $region3: #{tpu_custom_call.1} parent=1 // pred_check_branch
      %23 = sbr.rel (0) target = $region5
    $region4: #{tpu_custom_call.1} parent=1 // pred_region
      %25 = vsyncadd [#allocation5], 0
      %s26 = sshll.u32 %s0, 4
      %s27 = int_to_ptr.hbm [resolvable:$true] %s26
      %s28 = sshll.u32 [#allocation4], 4
      %s29 = int_to_ptr.vmem [resolvable:$true] %s28
      %34 = dma.hbm_to_vmem [thread:$0]  %s27, 512, %s29, [#allocation5], 128, 128, 8
    $region5: #{tpu_custom_call.1} parent=1 // pred_fallthru
      _
    // Predicated region
    $region6: #{tpu_custom_call.1} parent=1 // pred_check
      _
    $region7: #{tpu_custom_call.1} parent=1 // pred_check_branch
      %36 = sbr.rel (0) target = $region9
    $region8: #{tpu_custom_call.1} parent=1 // pred_region
      %38 = vsyncadd [#allocation9], 0
      %s39 = sshll.u32 %s1, 4
      %s40 = int_to_ptr.hbm [resolvable:$true] %s39
      %s41 = sshll.u32 [#allocation8], 4
      %s42 = int_to_ptr.vmem [resolvable:$true] %s41
      %47 = dma.hbm_to_vmem [thread:$0]  %s40, 512, %s42, [#allocation9], 128, 128, 8
    $region9: #{tpu_custom_call.1} parent=1 // pred_fallthru
      _
    // Predicated region
    $region10: #{tpu_custom_call.1} parent=1 // pred_check
      _
    $region11: #{tpu_custom_call.1} parent=1 // pred_check_branch
      %49 = sbr.rel (0) target = $region13
    $region12: #{tpu_custom_call.1} parent=1 // pred_region
      %51 = vsyncadd [#allocation9], 0
      %s52 = sshll.u32 %s2, 4
      %s53 = int_to_ptr.hbm [resolvable:$true] %s52
      %s54 = sshll.u32 [#allocation10], 4
      %s55 = int_to_ptr.vmem [resolvable:$true] %s54
      %60 = dma.hbm_to_vmem [thread:$0]  %s53, 512, %s55, [#allocation9], 128, 128, 8
    $region13: #{tpu_custom_call.1} parent=1 // pred_fallthru
      _
    // Predicated region
    $region14: #{tpu_custom_call.1} parent=1 // pred_check
      _
    $region15: #{tpu_custom_call.1} parent=1 // pred_check_branch
      %62 = sbr.rel (0) target = $region17
    $region16: #{tpu_custom_call.1} parent=1 // pred_region
      %64 = vsyncadd [#allocation12], 0
      %s65 = sshll.u32 %s3, 4
      %s66 = int_to_ptr.hbm [resolvable:$true] %s65
      %s67 = sshll.u32 [#allocation11], 4
      %s68 = int_to_ptr.vmem [resolvable:$true] %s67
      %73 = dma.hbm_to_vmem [thread:$0]  %s66, 512, %s68, [#allocation12], 128, 128, 8
    $region17: #{tpu_custom_call.1} parent=1 // pred_fallthru
      _
    // Predicated region
    $region18: #{tpu_custom_call.1} parent=1 // pred_check
      _
    $region19: #{tpu_custom_call.1} parent=1 // pred_check_branch
      %75 = sbr.rel (0) target = $region21
    $region20: #{tpu_custom_call.1} parent=1 // pred_region
      %77 = vsyncadd [#allocation12], 0
      %s78 = sshll.u32 %s4, 4
      %s79 = int_to_ptr.hbm [resolvable:$true] %s78
      %s80 = sshll.u32 [#allocation13], 4
      %s81 = int_to_ptr.vmem [resolvable:$true] %s80
      %86 = dma.hbm_to_vmem [thread:$0]  %s79, 512, %s81, [#allocation12], 128, 128, 8
    $region21: #{tpu_custom_call.1} parent=1 // pred_fallthru
      _
    // Predicated region
    $region22: #{tpu_custom_call.1} parent=1 // pred_check
      _
    $region23: #{tpu_custom_call.1} parent=1 // pred_check_branch
      %88 = sbr.rel (0) target = $region25
    $region24: #{tpu_custom_call.1} parent=1 // pred_region
      _
    $region25: #{tpu_custom_call.1} parent=1 // pred_fallthru
      _
    // Predicated region
    $region26: #{tpu_custom_call.1} parent=1 // pred_check
      _
    $region27: #{tpu_custom_call.1} parent=1 // pred_check_branch
      %90 = sbr.rel (0) target = $region29
    $region28: #{tpu_custom_call.1} parent=1 // pred_region
      _
    $region29: #{tpu_custom_call.1} parent=1 // pred_fallthru
      _
    // Predicated region
    $region30: #{tpu_custom_call.1} parent=1 // pred_check
      _
    $region31: #{tpu_custom_call.1} parent=1 // pred_check_branch
      %92 = sbr.rel (0) target = $region33
    $region32: #{tpu_custom_call.1} parent=1 // pred_region
      %94 = vsyncadd [#allocation15], 0
      %s95 = sshll.u32 %s7, 4
      %s96 = int_to_ptr.hbm [resolvable:$true] %s95
      %s97 = sshll.u32 [#allocation14], 4
      %s98 = int_to_ptr.vmem [resolvable:$true] %s97
      %103 = dma.hbm_to_vmem [thread:$0]  %s96, 512, %s98, [#allocation15], 128, 128, 8
    $region33: #{tpu_custom_call.1} parent=1 // pred_fallthru
      _
    // Predicated region
    $region34: #{tpu_custom_call.1} parent=1 // pred_check
      _
    $region35: #{tpu_custom_call.1} parent=1 // pred_check_branch
      %105 = sbr.rel (0) target = $region37
    $region36: #{tpu_custom_call.1} parent=1 // pred_region
      _
    $region37: #{tpu_custom_call.1} parent=1 // pred_fallthru
      _
    // Predicated region
    $region38: #{tpu_custom_call.1} parent=1 // pred_check
      _
    $region39: #{tpu_custom_call.1} parent=1 // pred_check_branch
      %107 = sbr.rel (0) target = $region41
    $region40: #{tpu_custom_call.1} parent=1 // pred_region
      _
    $region41: #{tpu_custom_call.1} parent=1 // pred_fallthru
      _
    // Predicated region
    $region42: #{tpu_custom_call.1} parent=1 // pred_check
      _
    $region43: #{tpu_custom_call.1} parent=1 // pred_check_branch
      %109 = sbr.rel (0) target = $region45
    $region44: #{tpu_custom_call.1} parent=1 // pred_region
      %111 = vsyncadd [#allocation7], 0
      %s113 = sshll.u32 %s10, 4
      %s114 = int_to_ptr.vmem [resolvable:$true] %s113
      %116 = dma.vmem_to_smem %s114, 16, [#allocation16], [#allocation7]
    $region45: #{tpu_custom_call.1} parent=1 // pred_fallthru
      _
    // Predicated region
    $region46: #{tpu_custom_call.1} parent=1 // pred_check
      _
    $region47: #{tpu_custom_call.1} parent=1 // pred_check_branch
      %118 = sbr.rel (0) target = $region49
    $region48: #{tpu_custom_call.1} parent=1 // pred_region
      %120 = dma.done [#allocation5], 512
    $region49: #{tpu_custom_call.1} parent=1 // pred_fallthru
      _
    // Predicated region
    $region50: #{tpu_custom_call.1} parent=1 // pred_check
      _
    $region51: #{tpu_custom_call.1} parent=1 // pred_check_branch
      %122 = sbr.rel (0) target = $region53
    $region52: #{tpu_custom_call.1} parent=1 // pred_region
      %124 = dma.done [#allocation9], 512
    $region53: #{tpu_custom_call.1} parent=1 // pred_fallthru
      _
    // Predicated region
    $region54: #{tpu_custom_call.1} parent=1 // pred_check
      _
    $region55: #{tpu_custom_call.1} parent=1 // pred_check_branch
      %126 = sbr.rel (0) target = $region57
    $region56: #{tpu_custom_call.1} parent=1 // pred_region
      %128 = dma.done [#allocation9], 512
    $region57: #{tpu_custom_call.1} parent=1 // pred_fallthru
      _
    // Predicated region
    $region58: #{tpu_custom_call.1} parent=1 // pred_check
      _
    $region59: #{tpu_custom_call.1} parent=1 // pred_check_branch
      %130 = sbr.rel (0) target = $region61
    $region60: #{tpu_custom_call.1} parent=1 // pred_region
      %132 = dma.done [#allocation12], 512
    $region61: #{tpu_custom_call.1} parent=1 // pred_fallthru
      _
    // Predicated region
    $region62: #{tpu_custom_call.1} parent=1 // pred_check
      _
    $region63: #{tpu_custom_call.1} parent=1 // pred_check_branch
      %134 = sbr.rel (0) target = $region65
    $region64: #{tpu_custom_call.1} parent=1 // pred_region
      %136 = dma.done [#allocation12], 512
    $region65: #{tpu_custom_call.1} parent=1 // pred_fallthru
      _
    // Predicated region
    $region66: #{tpu_custom_call.1} parent=1 // pred_check
      _
    $region67: #{tpu_custom_call.1} parent=1 // pred_check_branch
      %138 = sbr.rel (0) target = $region69
    $region68: #{tpu_custom_call.1} parent=1 // pred_region
      %140 = dma.done [#allocation15], 512
    $region69: #{tpu_custom_call.1} parent=1 // pred_fallthru
      _
    // Predicated region
    $region70: #{tpu_custom_call.1} parent=1 // pred_check
      _
    $region71: #{tpu_custom_call.1} parent=1 // pred_check_branch
      %142 = sbr.rel (0) target = $region73
    $region72: #{tpu_custom_call.1} parent=1 // pred_region
      %144 = dma.done [#allocation7], 16
    $region73: #{tpu_custom_call.1} parent=1 // pred_fallthru
      _
    %145 = sfence
    %v146 = vld [vmem:[#allocation4] sm:$0xff]
    %v147 = vld [vmem:[#allocation4 + $0x8] sm:$0xff]
    %v148 = vld [vmem:[#allocation4 + $0x10] sm:$0xff]
    %v149 = vld [vmem:[#allocation4 + $0x18] sm:$0xff]
    %v150 = vld [vmem:[#allocation11] sm:$0xff]
    %v151 = vld [vmem:[#allocation11 + $0x8] sm:$0xff]
    %v152 = vld [vmem:[#allocation11 + $0x10] sm:$0xff]
    %v153 = vld [vmem:[#allocation11 + $0x18] sm:$0xff]
    %vm154 = vcmask 261120
    %v156 = vsel %vm154, %v146, 0
    %v159 = vsel %vm154, %v147, 0
    %v162 = vsel %vm154, %v148, 0
    %v165 = vsel %vm154, %v149, 0
    %167 = vmatpush.msra.mxu0 0.0
    %168 = vmatpush.msra.mxu0 0.0
    %169 = vmatpush.msra.mxu0 0.0
    %170 = vmatpush.msra.mxu0 0.0
    %171 = vmatpush.msra.mxu0 0.0
    %172 = vmatpush.msra.mxu0 0.0
    %173 = vmatpush.msra.mxu0 0.0
    %174 = vmatpush.msra.mxu0 0.0
    %175 = vmatpush.msra.mxu0 0.0
    %176 = vmatpush.msra.mxu0 0.0
    %177 = vmatpush.msra.mxu0 0.0
    %178 = vmatpush.msra.mxu0 0.0
    %179 = vmatpush.msra.mxu0 %v153
    %180 = vmatpush.msra.mxu0 %v152
    %181 = vmatpush.msra.mxu0 %v151
    %182 = vmatpush.msra.mxu0 %v150
    %183 = vmatmul.f32.gmra.mxu0 %v156
    %v184 = vpop.f32.mrf.mxu0
    %v185 = vadd.f32 0.0, %v184
    %186 = vmatmul.f32.gmra.mxu0 %v159
    %v187 = vpop.f32.mrf.mxu0
    %v188 = vadd.f32 0.0, %v187
    %189 = vmatmul.f32.gmra.mxu0 %v162
    %v190 = vpop.f32.mrf.mxu0
    %v191 = vadd.f32 0.0, %v190
    %192 = vmatmul.f32.gmra.mxu0 %v165
    %v193 = vpop.f32.mrf.mxu0
    %v194 = vadd.f32 0.0, %v193
    %195 = vdwg.mxu0
    %v196 = vld [vmem:[#allocation13] sm:$0xff]
    %v197 = vld [vmem:[#allocation13 + $0x8] sm:$0xff]
    %v198 = vld [vmem:[#allocation13 + $0x10] sm:$0xff]
    %v199 = vld [vmem:[#allocation13 + $0x18] sm:$0xff]
    %200 = vmatpush.msra.mxu0 0.0
    %201 = vmatpush.msra.mxu0 0.0
    %202 = vmatpush.msra.mxu0 0.0
    %203 = vmatpush.msra.mxu0 0.0
    %204 = vmatpush.msra.mxu0 0.0
    %205 = vmatpush.msra.mxu0 0.0
    %206 = vmatpush.msra.mxu0 0.0
    %207 = vmatpush.msra.mxu0 0.0
    %208 = vmatpush.msra.mxu0 0.0
    %209 = vmatpush.msra.mxu0 0.0
    %210 = vmatpush.msra.mxu0 0.0
    %211 = vmatpush.msra.mxu0 0.0
    %212 = vmatpush.msra.mxu0 %v199
    %213 = vmatpush.msra.mxu0 %v198
    %214 = vmatpush.msra.mxu0 %v197
    %215 = vmatpush.msra.mxu0 %v196
    %216 = vmatmul.f32.gmra.mxu0 %v156
    %v217 = vpop.f32.mrf.mxu0
    %v218 = vadd.f32 0.0, %v217
    %219 = vmatmul.f32.gmra.mxu0 %v159
    %v220 = vpop.f32.mrf.mxu0
    %v221 = vadd.f32 0.0, %v220
    %222 = vmatmul.f32.gmra.mxu0 %v162
    %v223 = vpop.f32.mrf.mxu0
    %v224 = vadd.f32 0.0, %v223
    %225 = vmatmul.f32.gmra.mxu0 %v165
    %v226 = vpop.f32.mrf.mxu0
    %v227 = vadd.f32 0.0, %v226
    %228 = vdwg.mxu0
    %v229 = vld [vmem:[#allocation8] sm:$0xff]
    %v230 = vld [vmem:[#allocation8 + $0x8] sm:$0xff]
    %v231 = vld [vmem:[#allocation8 + $0x10] sm:$0xff]
    %v232 = vld [vmem:[#allocation8 + $0x18] sm:$0xff]
    %v233 = vld [vmem:[%s5] sm:$0x1]
    %v235 = vperm.slane %v233, 0
    %v238 = vsel %vm154, %v229, 0
    %v241 = vsel %vm154, %v230, 0
    %v244 = vsel %vm154, %v231, 0
    %v247 = vsel %vm154, %v232, 0
    %249 = vmatpush.msra.mxu0 0.0
    %250 = vmatpush.msra.mxu0 0.0
    %251 = vmatpush.msra.mxu0 0.0
    %252 = vmatpush.msra.mxu0 0.0
    %253 = vmatpush.msra.mxu0 0.0
    %254 = vmatpush.msra.mxu0 0.0
    %255 = vmatpush.msra.mxu0 0.0
    %256 = vmatpush.msra.mxu0 0.0
    %257 = vmatpush.msra.mxu0 0.0
    %258 = vmatpush.msra.mxu0 0.0
    %259 = vmatpush.msra.mxu0 0.0
    %260 = vmatpush.msra.mxu0 0.0
    %261 = vmatpush.msra.mxu0 %v194
    %262 = vmatpush.msra.mxu0 %v191
    %263 = vmatpush.msra.mxu0 %v188
    %264 = vmatpush.msra.mxu0 %v185
    %265 = vmatmul.f32.gmra.mxu0 %v238
    %v266 = vpop.f32.mrf.mxu0
    %v267 = vadd.f32 %v235, %v266
    %268 = vmatmul.f32.gmra.mxu0 %v241
    %v269 = vpop.f32.mrf.mxu0
    %v270 = vadd.f32 %v235, %v269
    %271 = vmatmul.f32.gmra.mxu0 %v244
    %v272 = vpop.f32.mrf.mxu0
    %v273 = vadd.f32 %v235, %v272
    %274 = vmatmul.f32.gmra.mxu0 %v247
    %v275 = vpop.f32.mrf.mxu0
    %v276 = vadd.f32 %v235, %v275
    %277 = vdwg.mxu0
    %v278 = vld [vmem:[#allocation10] sm:$0xff]
    %v279 = vld [vmem:[#allocation10 + $0x8] sm:$0xff]
    %v280 = vld [vmem:[#allocation10 + $0x10] sm:$0xff]
    %v281 = vld [vmem:[#allocation10 + $0x18] sm:$0xff]
    %v282 = vld [vmem:[%s6] sm:$0x1]
    %v284 = vperm.slane %v282, 0
    %v287 = vsel %vm154, %v278, 0
    %v290 = vsel %vm154, %v279, 0
    %v293 = vsel %vm154, %v280, 0
    %v296 = vsel %vm154, %v281, 0
    %298 = vmatpush.msra.mxu0 0.0
    %299 = vmatpush.msra.mxu0 0.0
    %300 = vmatpush.msra.mxu0 0.0
    %301 = vmatpush.msra.mxu0 0.0
    %302 = vmatpush.msra.mxu0 0.0
    %303 = vmatpush.msra.mxu0 0.0
    %304 = vmatpush.msra.mxu0 0.0
    %305 = vmatpush.msra.mxu0 0.0
    %306 = vmatpush.msra.mxu0 0.0
    %307 = vmatpush.msra.mxu0 0.0
    %308 = vmatpush.msra.mxu0 0.0
    %309 = vmatpush.msra.mxu0 0.0
    %310 = vmatpush.msra.mxu0 %v227
    %311 = vmatpush.msra.mxu0 %v224
    %312 = vmatpush.msra.mxu0 %v221
    %313 = vmatpush.msra.mxu0 %v218
    %314 = vmatmul.f32.gmra.mxu0 %v287
    %v315 = vpop.f32.mrf.mxu0
    %v316 = vadd.f32 %v284, %v315
    %317 = vmatmul.f32.gmra.mxu0 %v290
    %v318 = vpop.f32.mrf.mxu0
    %v319 = vadd.f32 %v284, %v318
    %320 = vmatmul.f32.gmra.mxu0 %v293
    %v321 = vpop.f32.mrf.mxu0
    %v322 = vadd.f32 %v284, %v321
    %323 = vmatmul.f32.gmra.mxu0 %v296
    %v324 = vpop.f32.mrf.mxu0
    %v325 = vadd.f32 %v284, %v324
    %326 = vdwg.mxu0
    %s327 = sld [smem:[#allocation16]]
    %s328 = sld [smem:[#allocation16 + $0x1]]
    %vm329 = vcmp.gt.f32.partialorder %v267, 0.0
    %vm330 = vcmp.gt.f32.partialorder %v270, 0.0
    %vm331 = vcmp.gt.f32.partialorder %v273, 0.0
    %vm332 = vcmp.gt.f32.partialorder %v276, 0.0
    %v333 = vstv %s327
    %v334 = vmul.f32 %v333, %v267
    %v335 = vmul.f32 %v333, %v270
    %v336 = vmul.f32 %v333, %v273
    %v337 = vmul.f32 %v333, %v276
    %v338 = vsel %vm329, %v267, %v334
    %v339 = vsel %vm330, %v270, %v335
    %v340 = vsel %vm331, %v273, %v336
    %v341 = vsel %vm332, %v276, %v337
    %vm342 = vcmp.gt.f32.partialorder %v316, 0.0
    %vm343 = vcmp.gt.f32.partialorder %v319, 0.0
    %vm344 = vcmp.gt.f32.partialorder %v322, 0.0
    %vm345 = vcmp.gt.f32.partialorder %v325, 0.0
    %v346 = vstv %s328
    %v347 = vmul.f32 %v346, %v316
    %v348 = vmul.f32 %v346, %v319
    %v349 = vmul.f32 %v346, %v322
    %v350 = vmul.f32 %v346, %v325
    %v351 = vsel %vm342, %v316, %v347
    %v352 = vsel %vm343, %v319, %v348
    %v353 = vsel %vm344, %v322, %v349
    %v354 = vsel %vm345, %v325, %v350
    %v355 = vsel %vm154, %v338, 0.0
    %v356 = vsel %vm154, %v339, 0.0
    %v357 = vadd.f32 %v355, %v356
    %v358 = vsel %vm154, %v340, 0.0
    %v359 = vadd.f32 %v357, %v358
    %v360 = vsel %vm154, %v341, 0.0
    %v361 = vadd.f32 %v359, %v360
    %v362 = vrot.slane %v361, 4
    %v363 = vadd.f32 %v361, %v362
    %v364 = vrot.slane %v363, 2
    %v365 = vadd.f32 %v363, %v364
    %v366 = vrot.slane %v365, 1
    %v367 = vadd.f32 %v365, %v366
    %v368 = vrcp.pop 32.0
    %v369 = vmul.f32 32.0, %v368
    %v370 = vsub.f32 1.0, %v369
    %v371 = vmul.f32 %v368, %v370
    %v372 = vadd.f32 %v368, %v371
    %vm373 = vweird.f32 %v368
    %v374 = vsel %vm373, %v368, %v372
    %v375 = vmul.f32 %v367, %v374
    %v376 = vsub.f32 0.0, %v375
    %v377 = vmul.f32 %v376, 1.442695
    %v378 = vpow.pop %v377
    %v379 = vadd.f32 %v378, 1.0
    %v380 = vrcp.pop %v379
    %v381 = vmul.f32 %v379, %v380
    %v382 = vsub.f32 1.0, %v381
    %v383 = vmul.f32 %v380, %v382
    %v384 = vadd.f32 %v380, %v383
    %vm385 = vweird.f32 %v379
    %vm386 = vweird.f32 %v380
    %vm387 = vmor %vm385, %vm386
    %v388 = vsel %vm387, %v380, %v384
    %v389 = vand.u32 2147483647, %v379
    %vm390 = vcmp.eq.f32.partialorder %v389, 8.507059e+37
    %v391 = vand.u32 %v379, 2147483648
    %v392 = vor.u32 1.1754944e-38, %v391
    %v393 = vsel %vm390, %v392, %v388
    %v394 = vmul.f32 1.0, %v393
    %v395 = vsel %vm154, %v351, 0.0
    %v396 = vsel %vm154, %v352, 0.0
    %v397 = vadd.f32 %v395, %v396
    %v398 = vsel %vm154, %v353, 0.0
    %v399 = vadd.f32 %v397, %v398
    %v400 = vsel %vm154, %v354, 0.0
    %v401 = vadd.f32 %v399, %v400
    %v402 = vrot.slane %v401, 4
    %v403 = vadd.f32 %v401, %v402
    %v404 = vrot.slane %v403, 2
    %v405 = vadd.f32 %v403, %v404
    %v406 = vrot.slane %v405, 1
    %v407 = vadd.f32 %v405, %v406
    %v408 = vmul.f32 %v407, %v374
    %v409 = vsub.f32 0.0, %v408
    %v410 = vmul.f32 %v409, 1.442695
    %v411 = vpow.pop %v410
    %v412 = vadd.f32 %v411, 1.0
    %v413 = vrcp.pop %v412
    %v414 = vmul.f32 %v412, %v413
    %v415 = vsub.f32 1.0, %v414
    %v416 = vmul.f32 %v413, %v415
    %v417 = vadd.f32 %v413, %v416
    %vm418 = vweird.f32 %v412
    %vm419 = vweird.f32 %v413
    %vm420 = vmor %vm418, %vm419
    %v421 = vsel %vm420, %v413, %v417
    %v422 = vand.u32 2147483647, %v412
    %vm423 = vcmp.eq.f32.partialorder %v422, 8.507059e+37
    %v424 = vand.u32 %v412, 2147483648
    %v425 = vor.u32 1.1754944e-38, %v424
    %v426 = vsel %vm423, %v425, %v421
    %v427 = vmul.f32 1.0, %v426
    %v428 = vld [vmem:[#allocation14] sm:$0xff]
    %v429 = vld [vmem:[#allocation14 + $0x8] sm:$0xff]
    %v430 = vld [vmem:[#allocation14 + $0x10] sm:$0xff]
    %v431 = vld [vmem:[#allocation14 + $0x18] sm:$0xff]
    %v433 = vsel %vm154, %v394, 0
    %v436 = vsel %vm154, %v428, 0
    %v439 = vsel %vm154, %v429, 0
    %v442 = vsel %vm154, %v430, 0
    %v445 = vsel %vm154, %v431, 0
    %447 = vmatpush.xpose.msra.mxu0 0.0
    %448 = vmatpush.xpose.msra.mxu0 0.0
    %449 = vmatpush.xpose.msra.mxu0 0.0
    %450 = vmatpush.xpose.msra.mxu0 0.0
    %451 = vmatpush.xpose.msra.mxu0 0.0
    %452 = vmatpush.xpose.msra.mxu0 0.0
    %453 = vmatpush.xpose.msra.mxu0 0.0
    %454 = vmatpush.xpose.msra.mxu0 0.0
    %455 = vmatpush.xpose.msra.mxu0 0.0
    %456 = vmatpush.xpose.msra.mxu0 0.0
    %457 = vmatpush.xpose.msra.mxu0 0.0
    %458 = vmatpush.xpose.msra.mxu0 0.0
    %459 = vmatpush.xpose.msra.mxu0 %v445
    %460 = vmatpush.xpose.msra.mxu0 %v442
    %461 = vmatpush.xpose.msra.mxu0 %v439
    %462 = vmatpush.xpose.msra.mxu0 %v436
    %463 = vmatmul.f32.gmra.mxu0 %v433
    %v464 = vpop.f32.mrf.mxu0
    %v465 = vadd.f32 0.0, %v464
    %466 = vdwg.mxu0
    %v468 = vsel %vm154, %v427, 0
    %470 = vmatpush.xpose.msra.mxu0 0.0
    %471 = vmatpush.xpose.msra.mxu0 0.0
    %472 = vmatpush.xpose.msra.mxu0 0.0
    %473 = vmatpush.xpose.msra.mxu0 0.0
    %474 = vmatpush.xpose.msra.mxu0 0.0
    %475 = vmatpush.xpose.msra.mxu0 0.0
    %476 = vmatpush.xpose.msra.mxu0 0.0
    %477 = vmatpush.xpose.msra.mxu0 0.0
    %478 = vmatpush.xpose.msra.mxu0 0.0
    %479 = vmatpush.xpose.msra.mxu0 0.0
    %480 = vmatpush.xpose.msra.mxu0 0.0
    %481 = vmatpush.xpose.msra.mxu0 0.0
    %482 = vmatpush.xpose.msra.mxu0 %v445
    %483 = vmatpush.xpose.msra.mxu0 %v442
    %484 = vmatpush.xpose.msra.mxu0 %v439
    %485 = vmatpush.xpose.msra.mxu0 %v436
    %486 = vmatmul.f32.gmra.mxu0 %v468
    %v487 = vpop.f32.mrf.mxu0
    %v488 = vadd.f32 0.0, %v487
    %489 = vdwg.mxu0
    %v490 = vld [vmem:[%s8] sm:$0x1]
    %v491 = vld [vmem:[%s8 + $0x1] sm:$0x1]
    %vm492 = vcmask 523264
    %493 = vst.msk [vmem:[#allocation2] sm:$0xff] %vm492, 0.0
    %494 = vst.msk [vmem:[#allocation3] sm:$0xff] %vm492, 0.0
    %vm495 = vcmask 253952
    %496 = vst.msk [vmem:[#allocation2 + $0x3] sm:$0x1] %vm495, %v488
    %v497 = vmul.f32 %v488, %v490
    %499 = vrot.lane.b32.xlu0 %v497, 32
    %v500 = vpop.permute.xlu0 %499
    %vm502 = vcmask 516352
    %503 = vst.msk [vmem:[#allocation2 + $0x6] sm:$0x1] %vm502, %v500
    %v504 = vmul.f32 %v488, %v491
    %506 = vrot.lane.b32.xlu0 %v504, 32
    %v507 = vpop.permute.xlu0 %506
    %509 = vst.msk [vmem:[#allocation2 + $0x7] sm:$0x1] %vm502, %v507
    %510 = vst.msk [vmem:[#allocation3 + $0x2] sm:$0x1] %vm495, %v465
    %v511 = vmul.f32 %v465, %v490
    %513 = vrot.lane.b32.xlu0 %v511, 32
    %v514 = vpop.permute.xlu0 %513
    %516 = vst.msk [vmem:[#allocation3 + $0x4] sm:$0x1] %vm502, %v514
    %v517 = vmul.f32 %v465, %v491
    %519 = vrot.lane.b32.xlu0 %v517, 32
    %v520 = vpop.permute.xlu0 %519
    %522 = vst.msk [vmem:[#allocation3 + $0x5] sm:$0x1] %vm502, %v520
    %v523 = vld [vmem:[#allocation2] sm:$0xff]
    %v524 = vld [vmem:[#allocation3] sm:$0xff]
    %v526 = vsel %vm492, %v524, 0
    %v529 = vsel %vm492, %v351, 0
    %v532 = vsel %vm492, %v352, 0
    %v535 = vsel %vm492, %v353, 0
    %v538 = vsel %vm492, %v354, 0
    %540 = vmatpush.xpose.msra.mxu0 0.0
    %541 = vmatpush.xpose.msra.mxu0 0.0
    %542 = vmatpush.xpose.msra.mxu0 0.0
    %543 = vmatpush.xpose.msra.mxu0 0.0
    %544 = vmatpush.xpose.msra.mxu0 0.0
    %545 = vmatpush.xpose.msra.mxu0 0.0
    %546 = vmatpush.xpose.msra.mxu0 0.0
    %547 = vmatpush.xpose.msra.mxu0 0.0
    %548 = vmatpush.xpose.msra.mxu0 0.0
    %549 = vmatpush.xpose.msra.mxu0 0.0
    %550 = vmatpush.xpose.msra.mxu0 0.0
    %551 = vmatpush.xpose.msra.mxu0 0.0
    %552 = vmatpush.xpose.msra.mxu0 %v538
    %553 = vmatpush.xpose.msra.mxu0 %v535
    %554 = vmatpush.xpose.msra.mxu0 %v532
    %555 = vmatpush.xpose.msra.mxu0 %v529
    %556 = vmatmul.f32.gmra.mxu0 %v526
    %v557 = vpop.f32.mrf.mxu0
    %v558 = vadd.f32 0.0, %v557
    %559 = vdwg.mxu0
    %v561 = vsel %vm492, %v523, 0
    %v564 = vsel %vm492, %v338, 0
    %v567 = vsel %vm492, %v339, 0
    %v570 = vsel %vm492, %v340, 0
    %v573 = vsel %vm492, %v341, 0
    %575 = vmatpush.xpose.msra.mxu0 0.0
    %576 = vmatpush.xpose.msra.mxu0 0.0
    %577 = vmatpush.xpose.msra.mxu0 0.0
    %578 = vmatpush.xpose.msra.mxu0 0.0
    %579 = vmatpush.xpose.msra.mxu0 0.0
    %580 = vmatpush.xpose.msra.mxu0 0.0
    %581 = vmatpush.xpose.msra.mxu0 0.0
    %582 = vmatpush.xpose.msra.mxu0 0.0
    %583 = vmatpush.xpose.msra.mxu0 0.0
    %584 = vmatpush.xpose.msra.mxu0 0.0
    %585 = vmatpush.xpose.msra.mxu0 0.0
    %586 = vmatpush.xpose.msra.mxu0 0.0
    %587 = vmatpush.xpose.msra.mxu0 %v573
    %588 = vmatpush.xpose.msra.mxu0 %v570
    %589 = vmatpush.xpose.msra.mxu0 %v567
    %590 = vmatpush.xpose.msra.mxu0 %v564
    %591 = vmatmul.f32.gmra.mxu0 %v561
    %v592 = vpop.f32.mrf.mxu0
    %v593 = vadd.f32 %v558, %v592
    %594 = vdwg.mxu0
    %v595 = vld [vmem:[%s9] sm:$0xff]
    %597 = vset.pattern.permute.xlu0 0
    %598 = vperm.xlu0 %597, %v595
    %v599 = vpop.permute.xlu0 %598
    %v601 = vadd.f32 %v593, %v599
    %602 = vst.msk [vmem:[#allocation17] sm:$0xff] %vm154, %v601
    %v603 = vmul.f32 %v338, %v338
    %v604 = vmul.f32 %v339, %v339
    %v605 = vmul.f32 %v340, %v340
    %v606 = vmul.f32 %v341, %v341
    %v607 = vsel %vm154, %v603, 0.0
    %608 = vadd.xlane.f32.xlu0 %v607
    %v609 = vpop.xlane.xlu0 %608
    %v610 = vsel %vm154, %v604, 0.0
    %611 = vadd.xlane.f32.xlu0 %v610
    %v612 = vpop.xlane.xlu0 %611
    %v613 = vsel %vm154, %v605, 0.0
    %614 = vadd.xlane.f32.xlu0 %v613
    %v615 = vpop.xlane.xlu0 %614
    %v616 = vsel %vm154, %v606, 0.0
    %617 = vadd.xlane.f32.xlu0 %v616
    %v618 = vpop.xlane.xlu0 %617
    %v619 = vadd.f32 %v609, 1e-08
    %v620 = vadd.f32 %v612, 1e-08
    %v621 = vadd.f32 %v615, 1e-08
    %v622 = vadd.f32 %v618, 1e-08
    %v623 = vrsqrt.pop %v619
    %v624 = vmul.f32 %v623, %v619
    %v625 = vmul.f32 %v624, %v623
    %v626 = vmul.f32 0.5, %v625
    %v627 = vsub.f32 1.5, %v626
    %v628 = vmul.f32 %v623, %v627
    %vm629 = vweird.f32 %v619
    %vm630 = vweird.f32 %v623
    %vm631 = vmor %vm629, %vm630
    %v632 = vsel %vm631, %v623, %v628
    %v633 = vrsqrt.pop %v620
    %v634 = vmul.f32 %v633, %v620
    %v635 = vmul.f32 %v634, %v633
    %v636 = vmul.f32 0.5, %v635
    %v637 = vsub.f32 1.5, %v636
    %v638 = vmul.f32 %v633, %v637
    %vm639 = vweird.f32 %v620
    %vm640 = vweird.f32 %v633
    %vm641 = vmor %vm639, %vm640
    %v642 = vsel %vm641, %v633, %v638
    %v643 = vrsqrt.pop %v621
    %v644 = vmul.f32 %v643, %v621
    %v645 = vmul.f32 %v644, %v643
    %v646 = vmul.f32 0.5, %v645
    %v647 = vsub.f32 1.5, %v646
    %v648 = vmul.f32 %v643, %v647
    %vm649 = vweird.f32 %v621
    %vm650 = vweird.f32 %v643
    %vm651 = vmor %vm649, %vm650
    %v652 = vsel %vm651, %v643, %v648
    %v653 = vrsqrt.pop %v622
    %v654 = vmul.f32 %v653, %v622
    %v655 = vmul.f32 %v654, %v653
    %v656 = vmul.f32 0.5, %v655
    %v657 = vsub.f32 1.5, %v656
    %v658 = vmul.f32 %v653, %v657
    %vm659 = vweird.f32 %v622
    %vm660 = vweird.f32 %v653
    %vm661 = vmor %vm659, %vm660
    %v662 = vsel %vm661, %v653, %v658
    %v663 = vmul.f32 %v338, %v632
    %v664 = vmul.f32 %v339, %v642
    %v665 = vmul.f32 %v340, %v652
    %v666 = vmul.f32 %v341, %v662
    %671 = vrot.lane.b32.xlu0 %v603, 96
    %v672 = vpop.permute.xlu0 %671
    %673 = vrot.lane.b32.xlu0 %v604, 96
    %v674 = vpop.permute.xlu0 %673
    %675 = vrot.lane.b32.xlu0 %v605, 96
    %v676 = vpop.permute.xlu0 %675
    %677 = vrot.lane.b32.xlu0 %v606, 96
    %v678 = vpop.permute.xlu0 %677
    %v683 = vsel %vm154, %v672, 0.0
    %684 = vadd.xlane.f32.xlu0 %v683
    %v685 = vpop.xlane.xlu0 %684
    %v686 = vsel %vm154, %v674, 0.0
    %687 = vadd.xlane.f32.xlu0 %v686
    %v688 = vpop.xlane.xlu0 %687
    %v689 = vsel %vm154, %v676, 0.0
    %690 = vadd.xlane.f32.xlu0 %v689
    %v691 = vpop.xlane.xlu0 %690
    %v692 = vsel %vm154, %v678, 0.0
    %693 = vadd.xlane.f32.xlu0 %v692
    %v694 = vpop.xlane.xlu0 %693
    %v695 = vadd.f32 %v685, 1e-08
    %v696 = vadd.f32 %v688, 1e-08
    %v697 = vadd.f32 %v691, 1e-08
    %v698 = vadd.f32 %v694, 1e-08
    %v699 = vrsqrt.pop %v695
    %v700 = vmul.f32 %v699, %v695
    %v701 = vmul.f32 %v700, %v699
    %v702 = vmul.f32 0.5, %v701
    %v703 = vsub.f32 1.5, %v702
    %v704 = vmul.f32 %v699, %v703
    %vm705 = vweird.f32 %v695
    %vm706 = vweird.f32 %v699
    %vm707 = vmor %vm705, %vm706
    %v708 = vsel %vm707, %v699, %v704
    %v709 = vrsqrt.pop %v696
    %v710 = vmul.f32 %v709, %v696
    %v711 = vmul.f32 %v710, %v709
    %v712 = vmul.f32 0.5, %v711
    %v713 = vsub.f32 1.5, %v712
    %v714 = vmul.f32 %v709, %v713
    %vm715 = vweird.f32 %v696
    %vm716 = vweird.f32 %v709
    %vm717 = vmor %vm715, %vm716
    %v718 = vsel %vm717, %v709, %v714
    %v719 = vrsqrt.pop %v697
    %v720 = vmul.f32 %v719, %v697
    %v721 = vmul.f32 %v720, %v719
    %v722 = vmul.f32 0.5, %v721
    %v723 = vsub.f32 1.5, %v722
    %v724 = vmul.f32 %v719, %v723
    %vm725 = vweird.f32 %v697
    %vm726 = vweird.f32 %v719
    %vm727 = vmor %vm725, %vm726
    %v728 = vsel %vm727, %v719, %v724
    %v729 = vrsqrt.pop %v698
    %v730 = vmul.f32 %v729, %v698
    %v731 = vmul.f32 %v730, %v729
    %v732 = vmul.f32 0.5, %v731
    %v733 = vsub.f32 1.5, %v732
    %v734 = vmul.f32 %v729, %v733
    %vm735 = vweird.f32 %v698
    %vm736 = vweird.f32 %v729
    %vm737 = vmor %vm735, %vm736
    %v738 = vsel %vm737, %v729, %v734
    %v739 = vmul.f32 %v338, %v708
    %v740 = vmul.f32 %v339, %v718
    %v741 = vmul.f32 %v340, %v728
    %v742 = vmul.f32 %v341, %v738
    %v743 = vmul.f32 %v351, %v351
    %v744 = vmul.f32 %v352, %v352
    %v745 = vmul.f32 %v353, %v353
    %v746 = vmul.f32 %v354, %v354
    %v747 = vsel %vm154, %v743, 0.0
    %748 = vadd.xlane.f32.xlu0 %v747
    %v749 = vpop.xlane.xlu0 %748
    %v750 = vsel %vm154, %v744, 0.0
    %751 = vadd.xlane.f32.xlu0 %v750
    %v752 = vpop.xlane.xlu0 %751
    %v753 = vsel %vm154, %v745, 0.0
    %754 = vadd.xlane.f32.xlu0 %v753
    %v755 = vpop.xlane.xlu0 %754
    %v756 = vsel %vm154, %v746, 0.0
    %757 = vadd.xlane.f32.xlu0 %v756
    %v758 = vpop.xlane.xlu0 %757
    %v759 = vadd.f32 %v749, 1e-08
    %v760 = vadd.f32 %v752, 1e-08
    %v761 = vadd.f32 %v755, 1e-08
    %v762 = vadd.f32 %v758, 1e-08
    %v763 = vrsqrt.pop %v759
    %v764 = vmul.f32 %v763, %v759
    %v765 = vmul.f32 %v764, %v763
    %v766 = vmul.f32 0.5, %v765
    %v767 = vsub.f32 1.5, %v766
    %v768 = vmul.f32 %v763, %v767
    %vm769 = vweird.f32 %v759
    %vm770 = vweird.f32 %v763
    %vm771 = vmor %vm769, %vm770
    %v772 = vsel %vm771, %v763, %v768
    %v773 = vrsqrt.pop %v760
    %v774 = vmul.f32 %v773, %v760
    %v775 = vmul.f32 %v774, %v773
    %v776 = vmul.f32 0.5, %v775
    %v777 = vsub.f32 1.5, %v776
    %v778 = vmul.f32 %v773, %v777
    %vm779 = vweird.f32 %v760
    %vm780 = vweird.f32 %v773
    %vm781 = vmor %vm779, %vm780
    %v782 = vsel %vm781, %v773, %v778
    %v783 = vrsqrt.pop %v761
    %v784 = vmul.f32 %v783, %v761
    %v785 = vmul.f32 %v784, %v783
    %v786 = vmul.f32 0.5, %v785
    %v787 = vsub.f32 1.5, %v786
    %v788 = vmul.f32 %v783, %v787
    %vm789 = vweird.f32 %v761
    %vm790 = vweird.f32 %v783
    %vm791 = vmor %vm789, %vm790
    %v792 = vsel %vm791, %v783, %v788
    %v793 = vrsqrt.pop %v762
    %v794 = vmul.f32 %v793, %v762
    %v795 = vmul.f32 %v794, %v793
    %v796 = vmul.f32 0.5, %v795
    %v797 = vsub.f32 1.5, %v796
    %v798 = vmul.f32 %v793, %v797
    %vm799 = vweird.f32 %v762
    %vm800 = vweird.f32 %v793
    %vm801 = vmor %vm799, %vm800
    %v802 = vsel %vm801, %v793, %v798
    %v803 = vmul.f32 %v351, %v772
    %v804 = vmul.f32 %v352, %v782
    %v805 = vmul.f32 %v353, %v792
    %v806 = vmul.f32 %v354, %v802
    %811 = vrot.lane.b32.xlu0 %v743, 96
    %v812 = vpop.permute.xlu0 %811
    %813 = vrot.lane.b32.xlu0 %v744, 96
    %v814 = vpop.permute.xlu0 %813
    %815 = vrot.lane.b32.xlu0 %v745, 96
    %v816 = vpop.permute.xlu0 %815
    %817 = vrot.lane.b32.xlu0 %v746, 96
    %v818 = vpop.permute.xlu0 %817
    %v823 = vsel %vm154, %v812, 0.0
    %824 = vadd.xlane.f32.xlu0 %v823
    %v825 = vpop.xlane.xlu0 %824
    %v826 = vsel %vm154, %v814, 0.0
    %827 = vadd.xlane.f32.xlu0 %v826
    %v828 = vpop.xlane.xlu0 %827
    %v829 = vsel %vm154, %v816, 0.0
    %830 = vadd.xlane.f32.xlu0 %v829
    %v831 = vpop.xlane.xlu0 %830
    %v832 = vsel %vm154, %v818, 0.0
    %833 = vadd.xlane.f32.xlu0 %v832
    %v834 = vpop.xlane.xlu0 %833
    %v835 = vadd.f32 %v825, 1e-08
    %v836 = vadd.f32 %v828, 1e-08
    %v837 = vadd.f32 %v831, 1e-08
    %v838 = vadd.f32 %v834, 1e-08
    %v839 = vrsqrt.pop %v835
    %v840 = vmul.f32 %v839, %v835
    %v841 = vmul.f32 %v840, %v839
    %v842 = vmul.f32 0.5, %v841
    %v843 = vsub.f32 1.5, %v842
    %v844 = vmul.f32 %v839, %v843
    %vm845 = vweird.f32 %v835
    %vm846 = vweird.f32 %v839
    %vm847 = vmor %vm845, %vm846
    %v848 = vsel %vm847, %v839, %v844
    %v849 = vrsqrt.pop %v836
    %v850 = vmul.f32 %v849, %v836
    %v851 = vmul.f32 %v850, %v849
    %v852 = vmul.f32 0.5, %v851
    %v853 = vsub.f32 1.5, %v852
    %v854 = vmul.f32 %v849, %v853
    %vm855 = vweird.f32 %v836
    %vm856 = vweird.f32 %v849
    %vm857 = vmor %vm855, %vm856
    %v858 = vsel %vm857, %v849, %v854
    %v859 = vrsqrt.pop %v837
    %v860 = vmul.f32 %v859, %v837
    %v861 = vmul.f32 %v860, %v859
    %v862 = vmul.f32 0.5, %v861
    %v863 = vsub.f32 1.5, %v862
    %v864 = vmul.f32 %v859, %v863
    %vm865 = vweird.f32 %v837
    %vm866 = vweird.f32 %v859
    %vm867 = vmor %vm865, %vm866
    %v868 = vsel %vm867, %v859, %v864
    %v869 = vrsqrt.pop %v838
    %v870 = vmul.f32 %v869, %v838
    %v871 = vmul.f32 %v870, %v869
    %v872 = vmul.f32 0.5, %v871
    %v873 = vsub.f32 1.5, %v872
    %v874 = vmul.f32 %v869, %v873
    %vm875 = vweird.f32 %v838
    %vm876 = vweird.f32 %v869
    %vm877 = vmor %vm875, %vm876
    %v878 = vsel %vm877, %v869, %v874
    %v879 = vmul.f32 %v351, %v848
    %v880 = vmul.f32 %v352, %v858
    %v881 = vmul.f32 %v353, %v868
    %v882 = vmul.f32 %v354, %v878
    %887 = vrot.lane.b32.xlu0 %v739, 96
    %v888 = vpop.permute.xlu0 %887
    %889 = vrot.lane.b32.xlu0 %v740, 96
    %v890 = vpop.permute.xlu0 %889
    %891 = vrot.lane.b32.xlu0 %v741, 96
    %v892 = vpop.permute.xlu0 %891
    %893 = vrot.lane.b32.xlu0 %v742, 96
    %v894 = vpop.permute.xlu0 %893
    %v896 = vsel %vm154, %v663, 0
    %v899 = vsel %vm154, %v664, 0
    %v902 = vsel %vm154, %v665, 0
    %v905 = vsel %vm154, %v666, 0
    %v907 = vsel %vm154, %v888, 0
    %v909 = vsel %vm154, %v890, 0
    %v911 = vsel %vm154, %v892, 0
    %v913 = vsel %vm154, %v894, 0
    %915 = vmatpush.xpose.msra.mxu0 0.0
    %916 = vmatpush.xpose.msra.mxu0 0.0
    %917 = vmatpush.xpose.msra.mxu0 0.0
    %918 = vmatpush.xpose.msra.mxu0 0.0
    %919 = vmatpush.xpose.msra.mxu0 0.0
    %920 = vmatpush.xpose.msra.mxu0 0.0
    %921 = vmatpush.xpose.msra.mxu0 0.0
    %922 = vmatpush.xpose.msra.mxu0 0.0
    %923 = vmatpush.xpose.msra.mxu0 0.0
    %924 = vmatpush.xpose.msra.mxu0 0.0
    %925 = vmatpush.xpose.msra.mxu0 0.0
    %926 = vmatpush.xpose.msra.mxu0 0.0
    %927 = vmatpush.xpose.msra.mxu0 %v913
    %928 = vmatpush.xpose.msra.mxu0 %v911
    %929 = vmatpush.xpose.msra.mxu0 %v909
    %930 = vmatpush.xpose.msra.mxu0 %v907
    %931 = vmatmul.f32.gmra.mxu0 %v896
    %v932 = vpop.f32.mrf.mxu0
    %v933 = vadd.f32 0.0, %v932
    %934 = vmatmul.f32.gmra.mxu0 %v899
    %v935 = vpop.f32.mrf.mxu0
    %v936 = vadd.f32 0.0, %v935
    %937 = vmatmul.f32.gmra.mxu0 %v902
    %v938 = vpop.f32.mrf.mxu0
    %v939 = vadd.f32 0.0, %v938
    %940 = vmatmul.f32.gmra.mxu0 %v905
    %v941 = vpop.f32.mrf.mxu0
    %v942 = vadd.f32 0.0, %v941
    %943 = vdwg.mxu0
    %948 = vrot.lane.b32.xlu0 %v879, 96
    %v949 = vpop.permute.xlu0 %948
    %950 = vrot.lane.b32.xlu0 %v880, 96
    %v951 = vpop.permute.xlu0 %950
    %952 = vrot.lane.b32.xlu0 %v881, 96
    %v953 = vpop.permute.xlu0 %952
    %954 = vrot.lane.b32.xlu0 %v882, 96
    %v955 = vpop.permute.xlu0 %954
    %v957 = vsel %vm154, %v803, 0
    %v960 = vsel %vm154, %v804, 0
    %v963 = vsel %vm154, %v805, 0
    %v966 = vsel %vm154, %v806, 0
    %v968 = vsel %vm154, %v949, 0
    %v970 = vsel %vm154, %v951, 0
    %v972 = vsel %vm154, %v953, 0
    %v974 = vsel %vm154, %v955, 0
    %976 = vmatpush.xpose.msra.mxu0 0.0
    %977 = vmatpush.xpose.msra.mxu0 0.0
    %978 = vmatpush.xpose.msra.mxu0 0.0
    %979 = vmatpush.xpose.msra.mxu0 0.0
    %980 = vmatpush.xpose.msra.mxu0 0.0
    %981 = vmatpush.xpose.msra.mxu0 0.0
    %982 = vmatpush.xpose.msra.mxu0 0.0
    %983 = vmatpush.xpose.msra.mxu0 0.0
    %984 = vmatpush.xpose.msra.mxu0 0.0
    %985 = vmatpush.xpose.msra.mxu0 0.0
    %986 = vmatpush.xpose.msra.mxu0 0.0
    %987 = vmatpush.xpose.msra.mxu0 0.0
    %988 = vmatpush.xpose.msra.mxu0 %v974
    %989 = vmatpush.xpose.msra.mxu0 %v972
    %990 = vmatpush.xpose.msra.mxu0 %v970
    %991 = vmatpush.xpose.msra.mxu0 %v968
    %992 = vmatmul.f32.gmra.mxu0 %v957
    %v993 = vpop.f32.mrf.mxu0
    %v994 = vadd.f32 0.0, %v993
    %995 = vmatmul.f32.gmra.mxu0 %v960
    %v996 = vpop.f32.mrf.mxu0
    %v997 = vadd.f32 0.0, %v996
    %998 = vmatmul.f32.gmra.mxu0 %v963
    %v999 = vpop.f32.mrf.mxu0
    %v1000 = vadd.f32 0.0, %v999
    %1001 = vmatmul.f32.gmra.mxu0 %v966
    %v1002 = vpop.f32.mrf.mxu0
    %v1003 = vadd.f32 0.0, %v1002
    %1004 = vdwg.mxu0
    %v1005 = vsel %vm154, %v933, -inf
    %v1006 = vsel %vm154, %v936, -inf
    %v1007 = vsel %vm154, %v939, -inf
    %v1008 = vsel %vm154, %v942, -inf
    %v1009 = vmax.f32 %v1005, %v1006
    %v1010 = vmax.f32 %v1007, %v1008
    %v1011 = vmax.f32 %v1009, %v1010
    %v1012 = vrot.slane %v1011, 4
    %v1013 = vmax.f32 %v1011, %v1012
    %v1014 = vrot.slane %v1013, 2
    %v1015 = vmax.f32 %v1013, %v1014
    %v1016 = vrot.slane %v1015, 1
    %v1017 = vmax.f32 %v1015, %v1016
    %1018 = vst.msk [vmem:[#allocation17] sm:$0x1] %vm495, %v1017
    %v1019 = vsel %vm154, %v994, -inf
    %v1020 = vsel %vm154, %v997, -inf
    %v1021 = vsel %vm154, %v1000, -inf
    %v1022 = vsel %vm154, %v1003, -inf
    %v1023 = vmax.f32 %v1019, %v1020
    %v1024 = vmax.f32 %v1021, %v1022
    %v1025 = vmax.f32 %v1023, %v1024
    %v1026 = vrot.slane %v1025, 4
    %v1027 = vmax.f32 %v1025, %v1026
    %v1028 = vrot.slane %v1027, 2
    %v1029 = vmax.f32 %v1027, %v1028
    %v1030 = vrot.slane %v1029, 1
    %v1031 = vmax.f32 %v1029, %v1030
    %1032 = vst.msk [vmem:[#allocation17 + $0x1] sm:$0x1] %vm495, %v1031
    // Predicated region
    $region74: #{tpu_custom_call.1} parent=1 // pred_check
      _
    $region75: #{tpu_custom_call.1} parent=1 // pred_check_branch
      %1034 = sbr.rel (0) target = $region77
    $region76: #{tpu_custom_call.1} parent=1 // pred_region
      %1036 = vsyncadd [#allocation6], 0
      %s1038 = sshll.u32 [#allocation17], 4
      %s1039 = int_to_ptr.vmem [resolvable:$true] %s1038
      %s1040 = sshll.u32 %s11, 4
      %s1041 = int_to_ptr.hbm [resolvable:$true] %s1040
      %1043 = dma.vmem_to_hbm [thread:$0]  %s1039, 128, %s1041, [#allocation6]
    $region77: #{tpu_custom_call.1} parent=1 // pred_fallthru
      _
    // Predicated region
    $region78: #{tpu_custom_call.1} parent=1 // pred_check
      _
    $region79: #{tpu_custom_call.1} parent=1 // pred_check_branch
      %1045 = sbr.rel (0) target = $region81
    $region80: #{tpu_custom_call.1} parent=1 // pred_region
      %1047 = dma.done [#allocation6], 128
    $region81: #{tpu_custom_call.1} parent=1 // pred_fallthru
      _
    %1048 = vsyncpa [#allocation5], 1
    %1049 = vsyncpa [#allocation9], 1
    %1050 = vsyncpa [#allocation12], 1
    %1051 = vsyncpa [#allocation15], 1
    %1052 = vsyncpa [#allocation6], 1
    %1053 = vsyncpa [#allocation7], 1

</llo_original>
